<compile_context>
chip_gen: v7x
topology: tpu7x:2x2x1
jax: 0.10.0
libtpu: 0.0.40
codegen_flags: <defaults>
</compile_context>

<pallas_src>
import jax
import jax.numpy as jnp
from jax.experimental import pallas as pl
from jax.experimental.pallas import tpu as pltpu

HIDDEN = 100            # nn.Linear(dim, 100)
HIDDEN_PAD = 128        # padded to a full lane width; extra columns are zeros
MAX_TILE_N = 8192       # rows per grid step cap (x-tile >= 1 MiB at dim >= 32)
XLA_SOFTMAX_THRESHOLD = 1 << 21   # above ~2M samples, normalize in XLA instead


def _round_up(x, m):
    return ((x + m - 1) // m) * m


def _vmem_limit_bytes():
    """Per-generation VMEM budget (v7x has 64 MiB/TC vs 128 MiB on v5e/v6e)."""
    try:
        phys = pltpu.get_tpu_info().vmem_capacity_bytes
    except Exception:
        phys = 64 * 1024 * 1024            # conservative (v7x-sized) fallback
    return min(int(phys * 0.7), 96 * 1024 * 1024)


def _pick_tile_n(n, dim, vmem_limit):
    """Rows per grid step: large enough that the x DMA (>= ~1 MiB) hides the
    ~0.35us per-step overhead, small enough to fit the VMEM budget."""
    # Per-row VMEM estimate: 2 double-buffered f32 x rows, ~4 live f32
    # (row, 128) temporaries (h / bias+relu / matmul acc), 2 buffered score rows.
    bytes_per_row = 2 * dim * 4 + 4 * HIDDEN_PAD * 4 + 2 * 4
    cap = max(256, (int(vmem_limit * 0.75) // bytes_per_row) // 256 * 256)
    want = max(1024, _round_up(pl.cdiv(1 << 20, 4 * dim), 256))
    return min(want, cap, MAX_TILE_N)


def _scores_kernel(x_ref, w1_ref, b1_ref, w2_ref, b2_ref, s_ref):
    """Per-tile raw scores: relu(x @ w1 + b1) @ w2 + b2  ->  (TILE_N, 1)."""
    h = jnp.dot(x_ref[...], w1_ref[...], preferred_element_type=jnp.float32)
    h = jnp.maximum(h + b1_ref[...], 0.0)                       # bias + ReLU (VPU)
    s_ref[...] = (jnp.dot(h, w2_ref[...], preferred_element_type=jnp.float32)
                  + b2_ref[...])                                # 2nd Linear (MXU)


def _softmax_kernel(s_ref, o_ref):
    """Exact softmax over the whole lane-dense (1, N) score row."""
    s = s_ref[...]
    m = jnp.max(s, axis=1, keepdims=True)
    e = jnp.exp(s - m)
    o_ref[...] = e / jnp.sum(e, axis=1, keepdims=True)          # exact divide


def attention_forward(x, w1, b1, w2, b2, *, tile_n=None):
    """x: (N, dim) f32 (native layout); weights as (in, out). Returns (1, N)."""
    n, dim = x.shape
    vmem_limit = _vmem_limit_bytes()
    if tile_n is None:
        tile_n = _pick_tile_n(n, dim, vmem_limit)
    if n <= tile_n:
        tile_n = n            # single full-extent block (always layout-legal)
    num_tiles = pl.cdiv(n, tile_n)

    # Tiny weight-only plumbing (x itself is streamed untouched from HBM).
    w1p = jnp.pad(w1.astype(jnp.float32), ((0, 0), (0, HIDDEN_PAD - HIDDEN)))
    b1p = jnp.pad(b1.reshape(1, -1).astype(jnp.float32),
                  ((0, 0), (0, HIDDEN_PAD - HIDDEN)))
    w2p = jnp.pad(w2.astype(jnp.float32), ((0, HIDDEN_PAD - HIDDEN), (0, 0)))
    b2r = b2.reshape(1, 1).astype(jnp.float32)

    # Pass 1: raw attention scores, tiled over samples.  Stateless grid axis ->
    # "parallel" (Mosaic may shard it across both TensorCores on v7x).
    scores = pl.pallas_call(
        _scores_kernel,
        grid=(num_tiles,),
        in_specs=[
            pl.BlockSpec((tile_n, dim), lambda i: (i, 0)),        # x (streamed)
            pl.BlockSpec((dim, HIDDEN_PAD), lambda i: (0, 0)),    # w1 (resident)
            pl.BlockSpec((1, HIDDEN_PAD), lambda i: (0, 0)),      # b1 (resident)
            pl.BlockSpec((HIDDEN_PAD, 1), lambda i: (0, 0)),      # w2 (resident)
            pl.BlockSpec((1, 1), lambda i: (0, 0)),               # b2 (resident)
        ],
        out_specs=pl.BlockSpec((tile_n, 1), lambda i: (i, 0)),
        out_shape=jax.ShapeDtypeStruct((n, 1), jnp.float32),
        compiler_params=pltpu.CompilerParams(
            dimension_semantics=("parallel",),
            vmem_limit_bytes=vmem_limit),
    )(x, w1p, b1p, w2p, b2r)

    # (n, 1) and (1, n) share the same contiguous HBM layout -> free reshape.
    scores_row = scores.reshape(1, n)

    if n > XLA_SOFTMAX_THRESHOLD:
        # TODO(synk): chunked two-pass Pallas softmax for N that no longer fits
        # a single VMEM block; plain XLA is fine at this (tiny) data volume.
        return jax.nn.softmax(scores_row, axis=1)

    # Pass 2: exact softmax in one full-width lane-dense block (no per-tile
    # grid overhead; weights sum to 1 to f32 accuracy).
    return pl.pallas_call(
        _softmax_kernel,
        grid=(1,),
        in_specs=[pl.BlockSpec((1, n), lambda i: (0, 0))],
        out_specs=pl.BlockSpec((1, n), lambda i: (0, 0)),
        out_shape=jax.ShapeDtypeStruct((1, n), jnp.float32),
        compiler_params=pltpu.CompilerParams(vmem_limit_bytes=vmem_limit),
    )(scores_row)


def init_params(key, dim):
    """Deterministic synthetic params with the shapes implied by __init__."""
    k1, k2, k3, k4 = jax.random.split(key, 4)
    w1 = jax.random.normal(k1, (dim, HIDDEN), dtype=jnp.float32) * 0.1
    b1 = jax.random.normal(k2, (1, HIDDEN), dtype=jnp.float32) * 0.1
    w2 = jax.random.normal(k3, (HIDDEN, 1), dtype=jnp.float32) * 0.1
    b2 = jax.random.normal(k4, (1, 1), dtype=jnp.float32) * 0.1
    return w1, b1, w2, b2


def reference_forward(x, w1, b1, w2, b2):
    """Pure-JAX f32 reference matching the PyTorch module."""
    h = jnp.maximum(x @ w1 + b1, 0.0)
    s = h @ w2 + b2                     # (N, 1)
    return jax.nn.softmax(s.T, axis=1)  # (1, N)


if __name__ == "__main__":
    key = jax.random.PRNGKey(0)
    kx, kp, kx2 = jax.random.split(key, 3)

    # Small case (shapes implied by the module): N samples of dim features.
    N, DIM = 8, 32
    x = jax.random.normal(kx, (N, DIM), dtype=jnp.float32)
    w1, b1, w2, b2 = init_params(kp, DIM)

    out = attention_forward(x, w1, b1, w2, b2)
    out = jax.block_until_ready(out)
    ref = reference_forward(x, w1, b1, w2, b2)
    assert out.shape == (1, N), out.shape
    assert jnp.allclose(out, ref, atol=1e-2, rtol=1e-2), (out, ref)
    assert jnp.allclose(jnp.sum(out), 1.0, atol=1e-3)

    # Exercise the tiled path (multi-step grid + partial last block).
    N2 = 300
    x2 = jax.random.normal(kx2, (N2, DIM), dtype=jnp.float32)
    out2 = jax.block_until_ready(attention_forward(x2, w1, b1, w2, b2, tile_n=128))
    ref2 = reference_forward(x2, w1, b1, w2, b2)
    assert out2.shape == (1, N2), out2.shape
    assert jnp.allclose(out2, ref2, atol=1e-2, rtol=1e-2)
    assert jnp.allclose(jnp.sum(out2), 1.0, atol=1e-3)

    print("KERNEL_OK")
</pallas_src>

<mosaic_0001>
module attributes {stable_mosaic.version = 11 : i64} {
  func.func @_scores_kernel(%arg0: i32, %arg1: memref<8x32xf32, #tpu.memory_space<vmem>>, %arg2: memref<32x128xf32, #tpu.memory_space<vmem>>, %arg3: memref<1x128xf32, #tpu.memory_space<vmem>>, %arg4: memref<128x1xf32, #tpu.memory_space<vmem>>, %arg5: memref<1x1xf32, #tpu.memory_space<vmem>>, %arg6: memref<8x1xf32, #tpu.memory_space<vmem>>) attributes {dimension_semantics = [#tpu.dimension_semantics<parallel>], iteration_bounds = array<i64: 1>, scalar_prefetch = 0 : i64, scratch_operands = 0 : i64, tpu.core_type = #tpu.core_type<tc>, window_params = [{transform_indices = @transform_0, window_bounds = array<i64: 8, 32>}, {pipeline_mode = #tpu.pipeline_mode<synchronous>, transform_indices = @transform_1, window_bounds = array<i64: 32, 128>}, {pipeline_mode = #tpu.pipeline_mode<synchronous>, transform_indices = @transform_2, window_bounds = array<i64: 1, 128>}, {pipeline_mode = #tpu.pipeline_mode<synchronous>, transform_indices = @transform_3, window_bounds = array<i64: 128, 1>}, {pipeline_mode = #tpu.pipeline_mode<synchronous>, transform_indices = @transform_4, window_bounds = array<i64: 1, 1>}, {transform_indices = @transform_5, window_bounds = array<i64: 8, 1>}]} {
    %c0 = arith.constant 0 : index
    %c0_0 = arith.constant 0 : index
    %0 = vector.load %arg1[%c0, %c0_0] : memref<8x32xf32, #tpu.memory_space<vmem>>, vector<8x32xf32>
    %c0_1 = arith.constant 0 : index
    %c0_2 = arith.constant 0 : index
    %1 = vector.load %arg2[%c0_1, %c0_2] : memref<32x128xf32, #tpu.memory_space<vmem>>, vector<32x128xf32>
    %cst = arith.constant dense<0.000000e+00> : vector<8x128xf32>
    %2 = tpu.matmul %0, %1, %cst {dimension_numbers = #tpu.dot_dimension_numbers<[1], [0], [0], [1], [0, 0, 1, 1], [], []>} : vector<8x32xf32>, vector<32x128xf32>, vector<8x128xf32> -> vector<8x128xf32>
    %c0_3 = arith.constant 0 : index
    %c0_4 = arith.constant 0 : index
    %3 = vector.load %arg3[%c0_3, %c0_4] : memref<1x128xf32, #tpu.memory_space<vmem>>, vector<1x128xf32>
    %4 = vector.broadcast %3 : vector<1x128xf32> to vector<8x128xf32>
    %5 = arith.addf %2, %4 : vector<8x128xf32>
    %cst_5 = arith.constant 0.000000e+00 : f32
    %6 = vector.broadcast %cst_5 : f32 to vector<8x128xf32>
    %7 = arith.maximumf %5, %6 : vector<8x128xf32>
    %c0_6 = arith.constant 0 : index
    %c0_7 = arith.constant 0 : index
    %8 = vector.load %arg4[%c0_6, %c0_7] : memref<128x1xf32, #tpu.memory_space<vmem>>, vector<128x1xf32>
    %cst_8 = arith.constant dense<0.000000e+00> : vector<8x1xf32>
    %9 = tpu.matmul %7, %8, %cst_8 {dimension_numbers = #tpu.dot_dimension_numbers<[1], [0], [0], [1], [0, 0, 1, 1], [], []>} : vector<8x128xf32>, vector<128x1xf32>, vector<8x1xf32> -> vector<8x1xf32>
    %c0_9 = arith.constant 0 : index
    %c0_10 = arith.constant 0 : index
    %10 = vector.load %arg5[%c0_9, %c0_10] : memref<1x1xf32, #tpu.memory_space<vmem>>, vector<1x1xf32>
    %11 = vector.broadcast %10 : vector<1x1xf32> to vector<8x1xf32>
    %12 = arith.addf %9, %11 : vector<8x1xf32>
    %c0_11 = arith.constant 0 : index
    %c0_12 = arith.constant 0 : index
    %13 = vector.load %arg6[%c0_11, %c0_12] : memref<8x1xf32, #tpu.memory_space<vmem>>, vector<8x1xf32>
    tpu.vector_store %arg6[%c0_11, %c0_12], %12 {strides = array<i32>} : memref<8x1xf32, #tpu.memory_space<vmem>>, vector<8x1xf32>,
    return
  }
  func.func @transform_0(%arg0: i32) -> (i32, i32) {
    %c0_i32 = arith.constant 0 : i32
    %c0_i32_0 = arith.constant 0 : i32
    return %arg0, %c0_i32 : i32, i32
  }
  func.func @transform_1(%arg0: i32) -> (i32, i32) {
    %c0_i32 = arith.constant 0 : i32
    %c0_i32_0 = arith.constant 0 : i32
    %c0_i32_1 = arith.constant 0 : i32
    return %c0_i32, %c0_i32_0 : i32, i32
  }
  func.func @transform_2(%arg0: i32) -> (i32, i32) {
    %c0_i32 = arith.constant 0 : i32
    %c0_i32_0 = arith.constant 0 : i32
    %c0_i32_1 = arith.constant 0 : i32
    return %c0_i32, %c0_i32_0 : i32, i32
  }
  func.func @transform_3(%arg0: i32) -> (i32, i32) {
    %c0_i32 = arith.constant 0 : i32
    %c0_i32_0 = arith.constant 0 : i32
    %c0_i32_1 = arith.constant 0 : i32
    return %c0_i32, %c0_i32_0 : i32, i32
  }
  func.func @transform_4(%arg0: i32) -> (i32, i32) {
    %c0_i32 = arith.constant 0 : i32
    %c0_i32_0 = arith.constant 0 : i32
    %c0_i32_1 = arith.constant 0 : i32
    return %c0_i32, %c0_i32_0 : i32, i32
  }
  func.func @transform_5(%arg0: i32) -> (i32, i32) {
    %c0_i32 = arith.constant 0 : i32
    %c0_i32_0 = arith.constant 0 : i32
    return %arg0, %c0_i32 : i32, i32
  }
}

</mosaic_0001>

<llo_original>
// kernel: tpu_custom_call.1
$region0: #{tpu_custom_call.1}
  #allocation0 [shape = 'u32[]', space=smem, size = 0x4, offset = 0x4, fixed_abs, tag = 'smem constant byte address 0x4 - core index']
  #allocation1 [shape = 'u32[144,128]{1,0:T(1,128)}', space=vmem, size = 0x12000, scoped, tag = 'internal scratch']
  #allocation2 [shape = 'f32[1,1]{1,0:T(1,128)S(1)}', space=vmem, size = 0x200, scoped, tag = 'scoped memory for tpu_custom_call.1']
  %s0 = inlined_call_operand.vmem [shape: f32[8,32], index: 0, kind: input, shape index: {}]
  %s1 = inlined_call_operand.vmem [shape: f32[32,128], index: 1, kind: input, shape index: {}]
  %s2 = inlined_call_operand.vmem [shape: f32[1,128], index: 2, kind: input, shape index: {}]
  %s3 = inlined_call_operand.vmem [shape: f32[128,1], index: 3, kind: input, shape index: {}]
  %s4 = inlined_call_operand.<no memory space> [shape: f32[1,1], index: 4, kind: input, shape index: {}]
  %s5 = inlined_call_operand.vmem [shape: f32[8,1], index: 5, kind: output, shape index: {}]
  %s6 = sld [smem:[#allocation0]]
  $region30: #{tpu_custom_call.1} parent=0
    _
  %s8 = ssub.s32 1, %s6
  %s9 = scalar_select 0, %s8, %s6
  %v10 = vstv %s4
  %11 = vst [vmem:[#allocation2] sm:$0x1] %v10
  // Predicated region
  $region2: #{tpu_custom_call.1} parent=0 // pred_check
    _
  $region3: #{tpu_custom_call.1} parent=0 // pred_check_branch
    %13 = sbr.rel (0) target = $region5
  $region4: #{tpu_custom_call.1} parent=0 // pred_region
    _
  $region5: #{tpu_custom_call.1} parent=0 // pred_fallthru
    _
  // Predicated region
  $region6: #{tpu_custom_call.1} parent=0 // pred_check
    _
  $region7: #{tpu_custom_call.1} parent=0 // pred_check_branch
    %15 = sbr.rel (0) target = $region9
  $region8: #{tpu_custom_call.1} parent=0 // pred_region
    _
  $region9: #{tpu_custom_call.1} parent=0 // pred_fallthru
    _
  // Predicated region
  $region10: #{tpu_custom_call.1} parent=0 // pred_check
    _
  $region11: #{tpu_custom_call.1} parent=0 // pred_check_branch
    %17 = sbr.rel (0) target = $region13
  $region12: #{tpu_custom_call.1} parent=0 // pred_region
    _
  $region13: #{tpu_custom_call.1} parent=0 // pred_fallthru
    _
  // Predicated region
  $region14: #{tpu_custom_call.1} parent=0 // pred_check
    _
  $region15: #{tpu_custom_call.1} parent=0 // pred_check_branch
    %19 = sbr.rel (0) target = $region17
  $region16: #{tpu_custom_call.1} parent=0 // pred_region
    _
  $region17: #{tpu_custom_call.1} parent=0 // pred_fallthru
    _
  // Predicated region
  $region18: #{tpu_custom_call.1} parent=0 // pred_check
    _
  $region19: #{tpu_custom_call.1} parent=0 // pred_check_branch
    %21 = sbr.rel (0) target = $region21
  $region20: #{tpu_custom_call.1} parent=0 // pred_region
    _
  $region21: #{tpu_custom_call.1} parent=0 // pred_fallthru
    _
  %v22 = vld [vmem:[%s0] sm:$0xff]
  %v23 = vld [vmem:[%s1] sm:$0xff]
  %v24 = vld [vmem:[%s1 + $0x8] sm:$0xff]
  %v25 = vld [vmem:[%s1 + $0x10] sm:$0xff]
  %v26 = vld [vmem:[%s1 + $0x18] sm:$0xff]
  %v27 = vld [vmem:[%s2] sm:$0x1]
  %v29 = vlaneseq
  %v30 = vshrl.u32 %v29, 7
  %v31 = vsub.s32 0, %v30
  %v32 = vrot.slane %v27, %v31
  %vm34 = vcmask 261120
  %v36 = vsel %vm34, %v22, 0
  %38 = vmatprep.subr.mxu0 0.0
  %39 = vmatpush1.msra.mxu0 %v23
  %40 = vmatprep.subr.mxu0 0.0
  %41 = vmatpush1.msra.mxu0 %v24
  %42 = vmatprep.subr.mxu0 0.0
  %43 = vmatpush1.msra.mxu0 %v25
  %44 = vmatprep.subr.mxu0 0.0
  %45 = vmatpush1.msra.mxu0 %v26
  %46 = vmatprep.subr.mxu0 0.0
  %47 = vmatpush1.msra.mxu0 0.0
  %48 = vmatprep.subr.mxu0 0.0
  %49 = vmatpush1.msra.mxu0 0.0
  %50 = vmatprep.subr.mxu0 0.0
  %51 = vmatpush1.msra.mxu0 0.0
  %52 = vmatprep.subr.mxu0 0.0
  %53 = vmatpush1.msra.mxu0 0.0
  %54 = vmatprep.subr.mxu0 0.0
  %55 = vmatpush1.msra.mxu0 0.0
  %56 = vmatprep.subr.mxu0 0.0
  %57 = vmatpush1.msra.mxu0 0.0
  %58 = vmatprep.subr.mxu0 0.0
  %59 = vmatpush1.msra.mxu0 0.0
  %60 = vmatprep.subr.mxu0 0.0
  %61 = vmatpush1.msra.mxu0 0.0
  %62 = vmatprep.subr.mxu0 0.0
  %63 = vmatpush1.msra.mxu0 0.0
  %64 = vmatprep.subr.mxu0 0.0
  %65 = vmatpush1.msra.mxu0 0.0
  %66 = vmatprep.subr.mxu0 0.0
  %67 = vmatpush1.msra.mxu0 0.0
  %68 = vmatprep.subr.mxu0 0.0
  %69 = vmatpush1.msra.mxu0 0.0
  %70 = vmatprep.subr.mxu0 0.0
  %71 = vmatpush1.msra.mxu0 0.0
  %72 = vmatprep.subr.mxu0 0.0
  %73 = vmatpush1.msra.mxu0 0.0
  %74 = vmatprep.subr.mxu0 0.0
  %75 = vmatpush1.msra.mxu0 0.0
  %76 = vmatprep.subr.mxu0 0.0
  %77 = vmatpush1.msra.mxu0 0.0
  %78 = vmatprep.subr.mxu0 0.0
  %79 = vmatpush1.msra.mxu0 0.0
  %80 = vmatprep.subr.mxu0 0.0
  %81 = vmatpush1.msra.mxu0 0.0
  %82 = vmatprep.subr.mxu0 0.0
  %83 = vmatpush1.msra.mxu0 0.0
  %84 = vmatprep.subr.mxu0 0.0
  %85 = vmatpush1.msra.mxu0 0.0
  %86 = vmatprep.subr.mxu0 0.0
  %87 = vmatpush1.msra.mxu0 0.0
  %88 = vmatprep.subr.mxu0 0.0
  %89 = vmatpush1.msra.mxu0 0.0
  %90 = vmatprep.subr.mxu0 0.0
  %91 = vmatpush1.msra.mxu0 0.0
  %92 = vmatprep.subr.mxu0 0.0
  %93 = vmatpush1.msra.mxu0 0.0
  %94 = vmatprep.subr.mxu0 0.0
  %95 = vmatpush1.msra.mxu0 0.0
  %96 = vmatprep.subr.mxu0 0.0
  %97 = vmatpush1.msra.mxu0 0.0
  %98 = vmatprep.subr.mxu0 0.0
  %99 = vmatpush1.msra.mxu0 0.0
  %100 = vmatprep.subr.mxu0 0.0
  %101 = vmatpush1.msra.mxu0 0.0
  %102 = vmatprep.mubr.f32.mxu0 0.0
  %103 = vmatmul.mubr.f32.gmra.mrb[0].mxu0 %v36
  %v104 = vpop.f32.mrb[0].mxu0
  %v105 = vadd.f32 %v32, %v104
  %v106 = vpop.f32.mrb[0].mxu0
  %107 = vdwg.mxu0
  %v108 = vmax.f32 %v105, 0.0
  %v109 = vld [vmem:[%s3] sm:$0xff]
  %v110 = vld [vmem:[%s3 + $0x8] sm:$0xff]
  %v111 = vld [vmem:[%s3 + $0x10] sm:$0xff]
  %v112 = vld [vmem:[%s3 + $0x18] sm:$0xff]
  %v113 = vld [vmem:[%s3 + $0x20] sm:$0xff]
  %v114 = vld [vmem:[%s3 + $0x28] sm:$0xff]
  %v115 = vld [vmem:[%s3 + $0x30] sm:$0xff]
  %v116 = vld [vmem:[%s3 + $0x38] sm:$0xff]
  %v117 = vld [vmem:[%s3 + $0x40] sm:$0xff]
  %v118 = vld [vmem:[%s3 + $0x48] sm:$0xff]
  %v119 = vld [vmem:[%s3 + $0x50] sm:$0xff]
  %v120 = vld [vmem:[%s3 + $0x58] sm:$0xff]
  %v121 = vld [vmem:[%s3 + $0x60] sm:$0xff]
  %v122 = vld [vmem:[%s3 + $0x68] sm:$0xff]
  %v123 = vld [vmem:[%s3 + $0x70] sm:$0xff]
  %v124 = vld [vmem:[%s3 + $0x78] sm:$0xff]
  %v125 = vld [vmem:[#allocation2] sm:$0x1]
  %v127 = vlaneseq
  %v128 = vshrl.u32 %v127, 7
  %v129 = vsub.s32 0, %v128
  %v130 = vrot.slane %v125, %v129
  %132 = vmatprep.subr.mxu0 0.0
  %133 = vmatpush1.msra.mxu0 %v109
  %134 = vmatprep.subr.mxu0 0.0
  %135 = vmatpush1.msra.mxu0 %v110
  %136 = vmatprep.subr.mxu0 0.0
  %137 = vmatpush1.msra.mxu0 %v111
  %138 = vmatprep.subr.mxu0 0.0
  %139 = vmatpush1.msra.mxu0 %v112
  %140 = vmatprep.subr.mxu0 0.0
  %141 = vmatpush1.msra.mxu0 %v113
  %142 = vmatprep.subr.mxu0 0.0
  %143 = vmatpush1.msra.mxu0 %v114
  %144 = vmatprep.subr.mxu0 0.0
  %145 = vmatpush1.msra.mxu0 %v115
  %146 = vmatprep.subr.mxu0 0.0
  %147 = vmatpush1.msra.mxu0 %v116
  %148 = vmatprep.subr.mxu0 0.0
  %149 = vmatpush1.msra.mxu0 %v117
  %150 = vmatprep.subr.mxu0 0.0
  %151 = vmatpush1.msra.mxu0 %v118
  %152 = vmatprep.subr.mxu0 0.0
  %153 = vmatpush1.msra.mxu0 %v119
  %154 = vmatprep.subr.mxu0 0.0
  %155 = vmatpush1.msra.mxu0 %v120
  %156 = vmatprep.subr.mxu0 0.0
  %157 = vmatpush1.msra.mxu0 %v121
  %158 = vmatprep.subr.mxu0 0.0
  %159 = vmatpush1.msra.mxu0 %v122
  %160 = vmatprep.subr.mxu0 0.0
  %161 = vmatpush1.msra.mxu0 %v123
  %162 = vmatprep.subr.mxu0 0.0
  %163 = vmatpush1.msra.mxu0 %v124
  %164 = vmatprep.subr.mxu0 0.0
  %165 = vmatpush1.msra.mxu0 0.0
  %166 = vmatprep.subr.mxu0 0.0
  %167 = vmatpush1.msra.mxu0 0.0
  %168 = vmatprep.subr.mxu0 0.0
  %169 = vmatpush1.msra.mxu0 0.0
  %170 = vmatprep.subr.mxu0 0.0
  %171 = vmatpush1.msra.mxu0 0.0
  %172 = vmatprep.subr.mxu0 0.0
  %173 = vmatpush1.msra.mxu0 0.0
  %174 = vmatprep.subr.mxu0 0.0
  %175 = vmatpush1.msra.mxu0 0.0
  %176 = vmatprep.subr.mxu0 0.0
  %177 = vmatpush1.msra.mxu0 0.0
  %178 = vmatprep.subr.mxu0 0.0
  %179 = vmatpush1.msra.mxu0 0.0
  %180 = vmatprep.subr.mxu0 0.0
  %181 = vmatpush1.msra.mxu0 0.0
  %182 = vmatprep.subr.mxu0 0.0
  %183 = vmatpush1.msra.mxu0 0.0
  %184 = vmatprep.subr.mxu0 0.0
  %185 = vmatpush1.msra.mxu0 0.0
  %186 = vmatprep.subr.mxu0 0.0
  %187 = vmatpush1.msra.mxu0 0.0
  %188 = vmatprep.subr.mxu0 0.0
  %189 = vmatpush1.msra.mxu0 0.0
  %190 = vmatprep.subr.mxu0 0.0
  %191 = vmatpush1.msra.mxu0 0.0
  %192 = vmatprep.subr.mxu0 0.0
  %193 = vmatpush1.msra.mxu0 0.0
  %194 = vmatprep.subr.mxu0 0.0
  %195 = vmatpush1.msra.mxu0 0.0
  %196 = vmatprep.mubr.f32.mxu0 0.0
  %197 = vmatmul.mubr.f32.gmra.mrb[0].mxu0 %v108
  %v198 = vpop.f32.mrb[0].mxu0
  %v199 = vadd.f32 %v130, %v198
  %v200 = vpop.f32.mrb[0].mxu0
  %201 = vdwg.mxu0
  %vm202 = vcmask 7168
  %203 = vst.msk [vmem:[%s5] sm:$0xff] %vm202, %v199
  // Predicated region
  $region22: #{tpu_custom_call.1} parent=0 // pred_check
    _
  $region23: #{tpu_custom_call.1} parent=0 // pred_check_branch
    %205 = sbr.rel (0) target = $region25
  $region24: #{tpu_custom_call.1} parent=0 // pred_region
    _
  $region25: #{tpu_custom_call.1} parent=0 // pred_fallthru
    _
  // Predicated region
  $region26: #{tpu_custom_call.1} parent=0 // pred_check
    _
  $region27: #{tpu_custom_call.1} parent=0 // pred_check_branch
    %207 = sbr.rel (0) target = $region29
  $region28: #{tpu_custom_call.1} parent=0 // pred_region
    _
  $region29: #{tpu_custom_call.1} parent=0 // pred_fallthru
    _

</llo_original>
